<compile_context>
chip_gen: v7x
topology: tpu7x:2x2x1
jax: 0.10.0
libtpu: 0.0.40
codegen_flags: <defaults>
</compile_context>

<pallas_src>
import jax
import jax.numpy as jnp
from jax.experimental import pallas as pl
from jax.experimental.pallas import tpu as pltpu


def _round_up(x: int, m: int) -> int:
    return ((x + m - 1) // m) * m


def _normal_dist_decoder_kernel(x_ref, w_ref, b_ref, loc_ref, scale_ref):
    """One batch tile: two small MXU matmuls + bias + stable softplus.

    x_ref:     (tile_b, F)        input rows (ragged last block masked by Pallas)
    w_ref:     (2, F, L)          stacked [W_mu.T ; W_logvar.T]
    b_ref:     (2, 1, L)          stacked [b_mu ; b_logvar], f32
    loc_ref:   (tile_b, L)        Normal loc
    scale_ref: (tile_b, L)        Normal scale (= softplus(logvar head))
    """
    # In-kernel dtype cast (rides VPU slack; keeps HBM traffic at x's native width).
    x = x_ref[...].astype(w_ref.dtype)

    loc = jnp.dot(x, w_ref[0], preferred_element_type=jnp.float32) + b_ref[0]
    z = jnp.dot(x, w_ref[1], preferred_element_type=jnp.float32) + b_ref[1]

    # Numerically stable softplus: max(z, 0) + log1p(exp(-|z|)); exp/log1p land
    # on the EUP slot, which is otherwise idle here.
    sp = jnp.maximum(z, 0.0) + jnp.log1p(jnp.exp(-jnp.abs(z)))
    # Tiny positive floor so Normal(loc, scale) stays valid on underflow.
    sp = jnp.maximum(sp, jnp.float32(jnp.finfo(jnp.float32).tiny))

    loc_ref[...] = loc.astype(loc_ref.dtype)
    scale_ref[...] = sp.astype(scale_ref.dtype)


def prepare_normal_dist_decoder_params(w_mu, b_mu, w_logvar, b_logvar,
                                        dtype=jnp.float32):
    """One-time weight layout prep (call at model load, not per forward).

    Args (PyTorch nn.Linear layout):
      w_mu, w_logvar: (L, F);  b_mu, b_logvar: (L,)
      dtype: streaming dtype for the weights (use jnp.bfloat16 to halve the
             weight + x HBM bytes; accumulation/bias/outputs stay f32).

    Returns:
      w_stacked: (2, F, L) dtype      [W_mu.T ; W_logvar.T]
      b_stacked: (2, 1, L) float32    [b_mu   ; b_logvar]
      latent_d:  L (Python int)
    """
    L, F = w_mu.shape
    w = jnp.stack([jnp.transpose(w_mu), jnp.transpose(w_logvar)],
                  axis=0).astype(dtype)                       # (2, F, L)
    b = jnp.stack([b_mu, b_logvar], axis=0).reshape(2, 1, L).astype(jnp.float32)
    return w, b, int(L)


def normal_dist_decoder_apply(x, w_stacked, b_stacked, latent_d, *, tile_b=1024):
    """Apply the decoder with pre-laid-out params.

    Args:
      x:         (B, F) input features (any float dtype; cast happens in-kernel).
      w_stacked: (2, F, L) from prepare_normal_dist_decoder_params.
      b_stacked: (2, 1, L) from prepare_normal_dist_decoder_params.
      latent_d:  L (static Python int).
      tile_b:    requested batch row tile (auto-clamped; multiple of 8).

    Returns:
      (loc, scale): each (B, L) float32 — the Normal's parameters.
    """
    B, F = x.shape
    L = int(latent_d)
    x_itemsize = jnp.dtype(x.dtype).itemsize
    w_itemsize = jnp.dtype(w_stacked.dtype).itemsize

    # ---- batch tile selection ------------------------------------------------
    tile = max(8, int(tile_b))
    # (a) keep double-buffered x + both double-buffered outputs well under the
    #     32 MiB scoped-VMEM default (holds on v5e/v6e/v7x alike).
    budget = 24 * 1024 * 1024
    fixed = w_stacked.size * w_itemsize + b_stacked.size * 4
    per_row = 2 * F * x_itemsize + 4 * L * 4
    max_rows = max(8, (budget - fixed) // per_row)
    tile = min(tile, int(max_rows))
    # (b) >= 2 grid steps whenever B allows, so v7x's second TensorCore works.
    tile = min(tile, _round_up(pl.cdiv(B, 2), 8))
    tile = max(8, (tile // 8) * 8)

    grid = (pl.cdiv(B, tile),)   # ragged last block masked by Pallas

    cost = pl.CostEstimate(
        flops=2 * B * F * 2 * L,
        transcendentals=2 * B * L,                       # exp + log1p, scale head
        bytes_accessed=(B * F * x_itemsize
                        + w_stacked.size * w_itemsize
                        + b_stacked.size * 4
                        + 2 * B * L * 4),
    )

    loc, scale = pl.pallas_call(
        _normal_dist_decoder_kernel,
        out_shape=(jax.ShapeDtypeStruct((B, L), jnp.float32),
                   jax.ShapeDtypeStruct((B, L), jnp.float32)),
        grid_spec=pltpu.PrefetchScalarGridSpec(
            num_scalar_prefetch=0,
            grid=grid,
            in_specs=[
                # x tiles march over the batch; weights/bias stay resident.
                pl.BlockSpec((tile, F), lambda i: (i, 0)),
                pl.BlockSpec((2, F, L), lambda i: (0, 0, 0)),
                pl.BlockSpec((2, 1, L), lambda i: (0, 0, 0)),
            ],
            out_specs=(
                pl.BlockSpec((tile, L), lambda i: (i, 0)),
                pl.BlockSpec((tile, L), lambda i: (i, 0)),
            ),
        ),
        compiler_params=pltpu.CompilerParams(
            dimension_semantics=("parallel",)),          # megacore split on v7x
        cost_estimate=cost,
    )(x, w_stacked, b_stacked)

    return loc, scale


def normal_dist_decoder(x, w_mu, b_mu, w_logvar, b_logvar, *, tile_b=1024,
                        dtype=jnp.float32):
    """Convenience wrapper: prep params + apply.  In real use call
    prepare_normal_dist_decoder_params once at model load."""
    w, b, L = prepare_normal_dist_decoder_params(w_mu, b_mu, w_logvar, b_logvar,
                                                 dtype=dtype)
    return normal_dist_decoder_apply(x, w, b, L, tile_b=tile_b)


def _reference(x, w_mu, b_mu, w_lv, b_lv):
    loc = x @ w_mu.T + b_mu
    lv = x @ w_lv.T + b_lv
    scale = jnp.maximum(lv, 0.0) + jnp.log1p(jnp.exp(-jnp.abs(lv)))
    return loc, scale


if __name__ == "__main__":
    # Small shapes consistent with the module: Xout is (batch, num_feat_in).
    batch = 8
    num_feat_in = 32
    latentD = 16

    key = jax.random.PRNGKey(0)
    kx, kw1, kb1, kw2, kb2, kx2 = jax.random.split(key, 6)

    x = jax.random.normal(kx, (batch, num_feat_in), dtype=jnp.float32)

    # Synthetic parameters (nn.Linear shapes: W=(out,in), b=(out,)).
    bound = 1.0 / jnp.sqrt(num_feat_in)
    w_mu = jax.random.uniform(kw1, (latentD, num_feat_in),
                              minval=-bound, maxval=bound, dtype=jnp.float32)
    b_mu = jax.random.uniform(kb1, (latentD,),
                              minval=-bound, maxval=bound, dtype=jnp.float32)
    w_lv = jax.random.uniform(kw2, (latentD, num_feat_in),
                              minval=-bound, maxval=bound, dtype=jnp.float32)
    b_lv = jax.random.uniform(kb2, (latentD,),
                              minval=-bound, maxval=bound, dtype=jnp.float32)

    # --- Main path: prep weights once (f32 parity), then apply. ---
    w_s, b_s, L = prepare_normal_dist_decoder_params(w_mu, b_mu, w_lv, b_lv)
    loc, scale = normal_dist_decoder_apply(x, w_s, b_s, L)
    jax.block_until_ready((loc, scale))

    loc_ref, scale_ref = _reference(x, w_mu, b_mu, w_lv, b_lv)
    assert loc.shape == (batch, latentD) and scale.shape == (batch, latentD)
    assert jnp.allclose(loc, loc_ref, atol=1e-5, rtol=1e-5)
    assert jnp.allclose(scale, scale_ref, atol=1e-5, rtol=1e-5)
    assert bool(jnp.all(scale > 0.0))  # valid Normal scale

    # --- Ragged batch path: B not a multiple of tile_b, grid > 1, no padding. ---
    batch2 = 300
    x2 = jax.random.normal(kx2, (batch2, num_feat_in), dtype=jnp.float32)
    loc2, scale2 = normal_dist_decoder_apply(x2, w_s, b_s, L, tile_b=128)
    jax.block_until_ready((loc2, scale2))

    loc2_ref, scale2_ref = _reference(x2, w_mu, b_mu, w_lv, b_lv)
    assert loc2.shape == (batch2, latentD) and scale2.shape == (batch2, latentD)
    assert jnp.allclose(loc2, loc2_ref, atol=1e-5, rtol=1e-5)
    assert jnp.allclose(scale2, scale2_ref, atol=1e-5, rtol=1e-5)

    # --- bf16 weight streaming path (f32 accumulation / outputs). ---
    w_bf, b_bf, _ = prepare_normal_dist_decoder_params(
        w_mu, b_mu, w_lv, b_lv, dtype=jnp.bfloat16)
    loc3, scale3 = normal_dist_decoder_apply(x, w_bf, b_bf, L)
    jax.block_until_ready((loc3, scale3))
    assert jnp.allclose(loc3, loc_ref, atol=6e-2, rtol=6e-2)
    assert jnp.allclose(scale3, scale_ref, atol=6e-2, rtol=6e-2)

    print("KERNEL_OK")
</pallas_src>

<mosaic_0001>
module attributes {stable_mosaic.version = 11 : i64} {
  func.func @_normal_dist_decoder_kernel(%arg0: i32, %arg1: memref<8x32xf32, #tpu.memory_space<vmem>>, %arg2: memref<2x32x16xf32, #tpu.memory_space<vmem>>, %arg3: memref<2x1x16xf32, #tpu.memory_space<vmem>>, %arg4: memref<8x16xf32, #tpu.memory_space<vmem>>, %arg5: memref<8x16xf32, #tpu.memory_space<vmem>>) attributes {dimension_semantics = [#tpu.dimension_semantics<parallel>], iteration_bounds = array<i64: 1>, scalar_prefetch = 0 : i64, scratch_operands = 0 : i64, tpu.core_type = #tpu.core_type<tc>, window_params = [{transform_indices = @transform_0, window_bounds = array<i64: 8, 32>}, {pipeline_mode = #tpu.pipeline_mode<synchronous>, transform_indices = @transform_1, window_bounds = array<i64: 2, 32, 16>}, {pipeline_mode = #tpu.pipeline_mode<synchronous>, transform_indices = @transform_2, window_bounds = array<i64: 2, 1, 16>}, {transform_indices = @transform_3, window_bounds = array<i64: 8, 16>}, {transform_indices = @transform_4, window_bounds = array<i64: 8, 16>}]} {
    %c0 = arith.constant 0 : index
    %c0_0 = arith.constant 0 : index
    %0 = vector.load %arg1[%c0, %c0_0] : memref<8x32xf32, #tpu.memory_space<vmem>>, vector<8x32xf32>
    %c0_1 = arith.constant 0 : index
    %c0_2 = arith.constant 0 : index
    %c0_3 = arith.constant 0 : index
    %1 = vector.load %arg2[%c0_1, %c0_2, %c0_3] : memref<2x32x16xf32, #tpu.memory_space<vmem>>, vector<1x32x16xf32>
    %2 = vector.shape_cast %1 : vector<1x32x16xf32> to vector<32x16xf32>
    %cst = arith.constant dense<0.000000e+00> : vector<8x16xf32>
    %3 = tpu.matmul %0, %2, %cst {dimension_numbers = #tpu.dot_dimension_numbers<[1], [0], [0], [1], [0, 0, 1, 1], [], []>} : vector<8x32xf32>, vector<32x16xf32>, vector<8x16xf32> -> vector<8x16xf32>
    %c0_4 = arith.constant 0 : index
    %c0_5 = arith.constant 0 : index
    %c0_6 = arith.constant 0 : index
    %4 = vector.load %arg3[%c0_4, %c0_5, %c0_6] : memref<2x1x16xf32, #tpu.memory_space<vmem>>, vector<1x1x16xf32>
    %5 = vector.shape_cast %4 : vector<1x1x16xf32> to vector<1x16xf32>
    %6 = vector.broadcast %5 : vector<1x16xf32> to vector<8x16xf32>
    %7 = arith.addf %3, %6 : vector<8x16xf32>
    %c1 = arith.constant 1 : index
    %c0_7 = arith.constant 0 : index
    %c0_8 = arith.constant 0 : index
    %8 = vector.load %arg2[%c1, %c0_7, %c0_8] : memref<2x32x16xf32, #tpu.memory_space<vmem>>, vector<1x32x16xf32>
    %9 = vector.shape_cast %8 : vector<1x32x16xf32> to vector<32x16xf32>
    %cst_9 = arith.constant dense<0.000000e+00> : vector<8x16xf32>
    %10 = tpu.matmul %0, %9, %cst_9 {dimension_numbers = #tpu.dot_dimension_numbers<[1], [0], [0], [1], [0, 0, 1, 1], [], []>} : vector<8x32xf32>, vector<32x16xf32>, vector<8x16xf32> -> vector<8x16xf32>
    %c1_10 = arith.constant 1 : index
    %c0_11 = arith.constant 0 : index
    %c0_12 = arith.constant 0 : index
    %11 = vector.load %arg3[%c1_10, %c0_11, %c0_12] : memref<2x1x16xf32, #tpu.memory_space<vmem>>, vector<1x1x16xf32>
    %12 = vector.shape_cast %11 : vector<1x1x16xf32> to vector<1x16xf32>
    %13 = vector.broadcast %12 : vector<1x16xf32> to vector<8x16xf32>
    %14 = arith.addf %10, %13 : vector<8x16xf32>
    %cst_13 = arith.constant 0.000000e+00 : f32
    %15 = vector.broadcast %cst_13 : f32 to vector<8x16xf32>
    %16 = arith.maximumf %14, %15 : vector<8x16xf32>
    %17 = math.absf %14 : vector<8x16xf32>
    %cst_14 = arith.constant 0.000000e+00 : f32
    %18 = vector.broadcast %cst_14 : f32 to vector<8x16xf32>
    %19 = arith.subf %18, %17 : vector<8x16xf32>
    %20 = math.exp %19 : vector<8x16xf32>
    %21 = math.log1p %20 : vector<8x16xf32>
    %22 = arith.addf %16, %21 : vector<8x16xf32>
    %cst_15 = arith.constant 1.17549435E-38 : f32
    %23 = vector.broadcast %cst_15 : f32 to vector<8x16xf32>
    %24 = arith.maximumf %22, %23 : vector<8x16xf32>
    %c0_16 = arith.constant 0 : index
    %c0_17 = arith.constant 0 : index
    %25 = vector.load %arg4[%c0_16, %c0_17] : memref<8x16xf32, #tpu.memory_space<vmem>>, vector<8x16xf32>
    tpu.vector_store %arg4[%c0_16, %c0_17], %7 {strides = array<i32>} : memref<8x16xf32, #tpu.memory_space<vmem>>, vector<8x16xf32>,
    %c0_18 = arith.constant 0 : index
    %c0_19 = arith.constant 0 : index
    %26 = vector.load %arg5[%c0_18, %c0_19] : memref<8x16xf32, #tpu.memory_space<vmem>>, vector<8x16xf32>
    tpu.vector_store %arg5[%c0_18, %c0_19], %24 {strides = array<i32>} : memref<8x16xf32, #tpu.memory_space<vmem>>, vector<8x16xf32>,
    return
  }
  func.func @transform_0(%arg0: i32) -> (i32, i32) {
    %c0_i32 = arith.constant 0 : i32
    %c0_i32_0 = arith.constant 0 : i32
    return %arg0, %c0_i32 : i32, i32
  }
  func.func @transform_1(%arg0: i32) -> (i32, i32, i32) {
    %c0_i32 = arith.constant 0 : i32
    %c0_i32_0 = arith.constant 0 : i32
    %c0_i32_1 = arith.constant 0 : i32
    %c0_i32_2 = arith.constant 0 : i32
    return %c0_i32, %c0_i32_0, %c0_i32_1 : i32, i32, i32
  }
  func.func @transform_2(%arg0: i32) -> (i32, i32, i32) {
    %c0_i32 = arith.constant 0 : i32
    %c0_i32_0 = arith.constant 0 : i32
    %c0_i32_1 = arith.constant 0 : i32
    %c0_i32_2 = arith.constant 0 : i32
    return %c0_i32, %c0_i32_0, %c0_i32_1 : i32, i32, i32
  }
  func.func @transform_3(%arg0: i32) -> (i32, i32) {
    %c0_i32 = arith.constant 0 : i32
    %c0_i32_0 = arith.constant 0 : i32
    return %arg0, %c0_i32 : i32, i32
  }
  func.func @transform_4(%arg0: i32) -> (i32, i32) {
    %c0_i32 = arith.constant 0 : i32
    %c0_i32_0 = arith.constant 0 : i32
    return %arg0, %c0_i32 : i32, i32
  }
}

</mosaic_0001>

<llo_original>
// kernel: tpu_custom_call.1
$region0: #{tpu_custom_call.1}
  #allocation0 [shape = 'u32[]', space=smem, size = 0x4, offset = 0x4, fixed_abs, tag = 'smem constant byte address 0x4 - core index']
  #allocation1 [shape = 'u32[144,128]{1,0:T(1,128)}', space=vmem, size = 0x12000, scoped, tag = 'internal scratch']
  %s0 = inlined_call_operand.vmem [shape: f32[8,32], index: 0, kind: input, shape index: {}]
  %s1 = inlined_call_operand.vmem [shape: f32[2,32,16], index: 1, kind: input, shape index: {}]
  %s2 = inlined_call_operand.vmem [shape: f32[2,1,16], index: 2, kind: input, shape index: {}]
  %s3 = inlined_call_operand.hbm [shape: f32[8,16], index: 3, kind: output, shape index: {0}]
  %s4 = inlined_call_operand.hbm [shape: f32[8,16], index: 4, kind: output, shape index: {1}]
  %5 = xla_tuple %s3, %s4
  %s6 = sld [smem:[#allocation0]]
  $region30: #{tpu_custom_call.1} parent=0
    _
  %s8 = ssub.s32 1, %s6
  %s9 = scalar_select 0, %s8, %s6
  $region1: #{tpu_custom_call.1} parent=0
    #allocation2 [shape = 'u8[4096]{0}', space=vmem, size = 0x1000, scoped, tag = 'output window, operand 0, single buffered']
    #allocation3 [shape = 's32[1]{0}', space=sflag, size = 0x4, scoped, tag = 'scoped memory for tpu_custom_call.1']
    #allocation4 [shape = 'u8[4096]{0}', space=vmem, size = 0x1000, scoped, tag = 'output window, operand 1, single buffered']
    #allocation5 [shape = 's32[1]{0}', space=sflag, size = 0x4, scoped, tag = 'scoped memory for tpu_custom_call.1']
    %10 = vsyncpa [#allocation3], 0
    %11 = vsyncpa [#allocation5], 0
    // Predicated region
    $region2: #{tpu_custom_call.1} parent=1 // pred_check
      _
    $region3: #{tpu_custom_call.1} parent=1 // pred_check_branch
      %13 = sbr.rel (0) target = $region5
    $region4: #{tpu_custom_call.1} parent=1 // pred_region
      _
    $region5: #{tpu_custom_call.1} parent=1 // pred_fallthru
      _
    // Predicated region
    $region6: #{tpu_custom_call.1} parent=1 // pred_check
      _
    $region7: #{tpu_custom_call.1} parent=1 // pred_check_branch
      %15 = sbr.rel (0) target = $region9
    $region8: #{tpu_custom_call.1} parent=1 // pred_region
      _
    $region9: #{tpu_custom_call.1} parent=1 // pred_fallthru
      _
    // Predicated region
    $region10: #{tpu_custom_call.1} parent=1 // pred_check
      _
    $region11: #{tpu_custom_call.1} parent=1 // pred_check_branch
      %17 = sbr.rel (0) target = $region13
    $region12: #{tpu_custom_call.1} parent=1 // pred_region
      _
    $region13: #{tpu_custom_call.1} parent=1 // pred_fallthru
      _
    %v18 = vld [vmem:[%s0] sm:$0xff]
    %v19 = vld [vmem:[%s1] sm:$0xff]
    %v20 = vld [vmem:[%s1 + $0x8] sm:$0xff]
    %v21 = vld [vmem:[%s1 + $0x10] sm:$0xff]
    %v22 = vld [vmem:[%s1 + $0x18] sm:$0xff]
    %v23 = vld [vmem:[%s2] sm:$0x1]
    %v25 = vlaneseq
    %v26 = vshrl.u32 %v25, 7
    %v27 = vsub.s32 0, %v26
    %v28 = vrot.slane %v23, %v27
    %vm30 = vcmask 261120
    %v32 = vsel %vm30, %v18, 0
    %34 = vmatprep.subr.mxu0 0.0
    %35 = vmatpush1.msra.mxu0 %v19
    %36 = vmatprep.subr.mxu0 0.0
    %37 = vmatpush1.msra.mxu0 %v20
    %38 = vmatprep.subr.mxu0 0.0
    %39 = vmatpush1.msra.mxu0 %v21
    %40 = vmatprep.subr.mxu0 0.0
    %41 = vmatpush1.msra.mxu0 %v22
    %42 = vmatprep.subr.mxu0 0.0
    %43 = vmatpush1.msra.mxu0 0.0
    %44 = vmatprep.subr.mxu0 0.0
    %45 = vmatpush1.msra.mxu0 0.0
    %46 = vmatprep.subr.mxu0 0.0
    %47 = vmatpush1.msra.mxu0 0.0
    %48 = vmatprep.subr.mxu0 0.0
    %49 = vmatpush1.msra.mxu0 0.0
    %50 = vmatprep.subr.mxu0 0.0
    %51 = vmatpush1.msra.mxu0 0.0
    %52 = vmatprep.subr.mxu0 0.0
    %53 = vmatpush1.msra.mxu0 0.0
    %54 = vmatprep.subr.mxu0 0.0
    %55 = vmatpush1.msra.mxu0 0.0
    %56 = vmatprep.subr.mxu0 0.0
    %57 = vmatpush1.msra.mxu0 0.0
    %58 = vmatprep.subr.mxu0 0.0
    %59 = vmatpush1.msra.mxu0 0.0
    %60 = vmatprep.subr.mxu0 0.0
    %61 = vmatpush1.msra.mxu0 0.0
    %62 = vmatprep.subr.mxu0 0.0
    %63 = vmatpush1.msra.mxu0 0.0
    %64 = vmatprep.subr.mxu0 0.0
    %65 = vmatpush1.msra.mxu0 0.0
    %66 = vmatprep.subr.mxu0 0.0
    %67 = vmatpush1.msra.mxu0 0.0
    %68 = vmatprep.subr.mxu0 0.0
    %69 = vmatpush1.msra.mxu0 0.0
    %70 = vmatprep.subr.mxu0 0.0
    %71 = vmatpush1.msra.mxu0 0.0
    %72 = vmatprep.subr.mxu0 0.0
    %73 = vmatpush1.msra.mxu0 0.0
    %74 = vmatprep.subr.mxu0 0.0
    %75 = vmatpush1.msra.mxu0 0.0
    %76 = vmatprep.subr.mxu0 0.0
    %77 = vmatpush1.msra.mxu0 0.0
    %78 = vmatprep.subr.mxu0 0.0
    %79 = vmatpush1.msra.mxu0 0.0
    %80 = vmatprep.subr.mxu0 0.0
    %81 = vmatpush1.msra.mxu0 0.0
    %82 = vmatprep.subr.mxu0 0.0
    %83 = vmatpush1.msra.mxu0 0.0
    %84 = vmatprep.subr.mxu0 0.0
    %85 = vmatpush1.msra.mxu0 0.0
    %86 = vmatprep.subr.mxu0 0.0
    %87 = vmatpush1.msra.mxu0 0.0
    %88 = vmatprep.subr.mxu0 0.0
    %89 = vmatpush1.msra.mxu0 0.0
    %90 = vmatprep.subr.mxu0 0.0
    %91 = vmatpush1.msra.mxu0 0.0
    %92 = vmatprep.subr.mxu0 0.0
    %93 = vmatpush1.msra.mxu0 0.0
    %94 = vmatprep.subr.mxu0 0.0
    %95 = vmatpush1.msra.mxu0 0.0
    %96 = vmatprep.subr.mxu0 0.0
    %97 = vmatpush1.msra.mxu0 0.0
    %98 = vmatprep.mubr.f32.mxu0 0.0
    %99 = vmatmul.mubr.f32.gmra.mrb[0].mxu0 %v32
    %v100 = vpop.f32.mrb[0].mxu0
    %v101 = vadd.f32 %v28, %v100
    %v102 = vpop.f32.mrb[0].mxu0
    %103 = vdwg.mxu0
    %s104 = scalar_lea.vmem %s1, 32
    %v105 = vld [vmem:[%s104] sm:$0xff]
    %v106 = vld [vmem:[%s104 + $0x8] sm:$0xff]
    %v107 = vld [vmem:[%s104 + $0x10] sm:$0xff]
    %v108 = vld [vmem:[%s104 + $0x18] sm:$0xff]
    %s109 = scalar_lea.vmem %s2, 1
    %v110 = vld [vmem:[%s109] sm:$0x1]
    %v112 = vlaneseq
    %v113 = vshrl.u32 %v112, 7
    %v114 = vsub.s32 0, %v113
    %v115 = vrot.slane %v110, %v114
    %117 = vmatprep.subr.mxu0 0.0
    %118 = vmatpush1.msra.mxu0 %v105
    %119 = vmatprep.subr.mxu0 0.0
    %120 = vmatpush1.msra.mxu0 %v106
    %121 = vmatprep.subr.mxu0 0.0
    %122 = vmatpush1.msra.mxu0 %v107
    %123 = vmatprep.subr.mxu0 0.0
    %124 = vmatpush1.msra.mxu0 %v108
    %125 = vmatprep.subr.mxu0 0.0
    %126 = vmatpush1.msra.mxu0 0.0
    %127 = vmatprep.subr.mxu0 0.0
    %128 = vmatpush1.msra.mxu0 0.0
    %129 = vmatprep.subr.mxu0 0.0
    %130 = vmatpush1.msra.mxu0 0.0
    %131 = vmatprep.subr.mxu0 0.0
    %132 = vmatpush1.msra.mxu0 0.0
    %133 = vmatprep.subr.mxu0 0.0
    %134 = vmatpush1.msra.mxu0 0.0
    %135 = vmatprep.subr.mxu0 0.0
    %136 = vmatpush1.msra.mxu0 0.0
    %137 = vmatprep.subr.mxu0 0.0
    %138 = vmatpush1.msra.mxu0 0.0
    %139 = vmatprep.subr.mxu0 0.0
    %140 = vmatpush1.msra.mxu0 0.0
    %141 = vmatprep.subr.mxu0 0.0
    %142 = vmatpush1.msra.mxu0 0.0
    %143 = vmatprep.subr.mxu0 0.0
    %144 = vmatpush1.msra.mxu0 0.0
    %145 = vmatprep.subr.mxu0 0.0
    %146 = vmatpush1.msra.mxu0 0.0
    %147 = vmatprep.subr.mxu0 0.0
    %148 = vmatpush1.msra.mxu0 0.0
    %149 = vmatprep.subr.mxu0 0.0
    %150 = vmatpush1.msra.mxu0 0.0
    %151 = vmatprep.subr.mxu0 0.0
    %152 = vmatpush1.msra.mxu0 0.0
    %153 = vmatprep.subr.mxu0 0.0
    %154 = vmatpush1.msra.mxu0 0.0
    %155 = vmatprep.subr.mxu0 0.0
    %156 = vmatpush1.msra.mxu0 0.0
    %157 = vmatprep.subr.mxu0 0.0
    %158 = vmatpush1.msra.mxu0 0.0
    %159 = vmatprep.subr.mxu0 0.0
    %160 = vmatpush1.msra.mxu0 0.0
    %161 = vmatprep.subr.mxu0 0.0
    %162 = vmatpush1.msra.mxu0 0.0
    %163 = vmatprep.subr.mxu0 0.0
    %164 = vmatpush1.msra.mxu0 0.0
    %165 = vmatprep.subr.mxu0 0.0
    %166 = vmatpush1.msra.mxu0 0.0
    %167 = vmatprep.subr.mxu0 0.0
    %168 = vmatpush1.msra.mxu0 0.0
    %169 = vmatprep.subr.mxu0 0.0
    %170 = vmatpush1.msra.mxu0 0.0
    %171 = vmatprep.subr.mxu0 0.0
    %172 = vmatpush1.msra.mxu0 0.0
    %173 = vmatprep.subr.mxu0 0.0
    %174 = vmatpush1.msra.mxu0 0.0
    %175 = vmatprep.subr.mxu0 0.0
    %176 = vmatpush1.msra.mxu0 0.0
    %177 = vmatprep.subr.mxu0 0.0
    %178 = vmatpush1.msra.mxu0 0.0
    %179 = vmatprep.subr.mxu0 0.0
    %180 = vmatpush1.msra.mxu0 0.0
    %181 = vmatprep.mubr.f32.mxu0 0.0
    %182 = vmatmul.mubr.f32.gmra.mrb[0].mxu0 %v32
    %v183 = vpop.f32.mrb[0].mxu0
    %v184 = vadd.f32 %v115, %v183
    %v185 = vpop.f32.mrb[0].mxu0
    %186 = vdwg.mxu0
    %v187 = vmax.f32 %v184, 0.0
    %v188 = vand.u32 2147483647, %v184
    %v189 = vsub.f32 0.0, %v188
    %v190 = vmul.f32 %v189, 1.442695
    %v191 = vpow.pop %v190
    %v192 = vadd.f32 %v191, 1.0
    %v193 = vlog2.pop %v192
    %v194 = vmul.f32 %v193, 0.6931472
    %v195 = vmul.f32 -0.5, %v191
    %v196 = vadd.f32 %v195, 1.0
    %v197 = vmul.f32 %v196, %v191
    %v198 = vand.u32 2147483647, %v191
    %vm199 = vcmp.lt.f32.partialorder %v198, 0.0004427343
    %v200 = vsel %vm199, %v197, %v194
    %v201 = vadd.f32 %v187, %v200
    %v202 = vmax.f32 %v201, 1.1754944e-38
    %vm203 = vcmask 130048
    %204 = vst.msk [vmem:[#allocation2] sm:$0xff] %vm203, %v101
    %205 = vst.msk [vmem:[#allocation4] sm:$0xff] %vm203, %v202
    // Predicated region
    $region14: #{tpu_custom_call.1} parent=1 // pred_check
      _
    $region15: #{tpu_custom_call.1} parent=1 // pred_check_branch
      %207 = sbr.rel (0) target = $region17
    $region16: #{tpu_custom_call.1} parent=1 // pred_region
      %s209 = ssub.s32 128, 128
      %210 = vsyncadd [#allocation3], %s209
      %s212 = sshll.u32 [#allocation2], 4
      %s213 = int_to_ptr.vmem [resolvable:$true] %s212
      %215 = dma.vmem_to_hbm [thread:$0]  %s213, 128, %s3, [#allocation3]
    $region17: #{tpu_custom_call.1} parent=1 // pred_fallthru
      _
    // Predicated region
    $region18: #{tpu_custom_call.1} parent=1 // pred_check
      _
    $region19: #{tpu_custom_call.1} parent=1 // pred_check_branch
      %217 = sbr.rel (0) target = $region21
    $region20: #{tpu_custom_call.1} parent=1 // pred_region
      %s219 = ssub.s32 128, 128
      %220 = vsyncadd [#allocation5], %s219
      %s222 = sshll.u32 [#allocation4], 4
      %s223 = int_to_ptr.vmem [resolvable:$true] %s222
      %225 = dma.vmem_to_hbm [thread:$0]  %s223, 128, %s4, [#allocation5]
    $region21: #{tpu_custom_call.1} parent=1 // pred_fallthru
      _
    // Predicated region
    $region22: #{tpu_custom_call.1} parent=1 // pred_check
      _
    $region23: #{tpu_custom_call.1} parent=1 // pred_check_branch
      %227 = sbr.rel (0) target = $region25
    $region24: #{tpu_custom_call.1} parent=1 // pred_region
      %228 = dma.done [#allocation3], 128
    $region25: #{tpu_custom_call.1} parent=1 // pred_fallthru
      _
    // Predicated region
    $region26: #{tpu_custom_call.1} parent=1 // pred_check
      _
    $region27: #{tpu_custom_call.1} parent=1 // pred_check_branch
      %230 = sbr.rel (0) target = $region29
    $region28: #{tpu_custom_call.1} parent=1 // pred_region
      %231 = dma.done [#allocation5], 128
    $region29: #{tpu_custom_call.1} parent=1 // pred_fallthru
      _
    %232 = vsyncpa [#allocation3], 1
    %233 = vsyncpa [#allocation5], 1

</llo_original>
